<compile_context>
chip_gen: v6e
topology: v6e:2x2x1
jax: 0.10.0
libtpu: 0.0.40
codegen_flags: <defaults>
</compile_context>

<pallas_src>
import jax
import jax.numpy as jnp
from jax import lax
from jax.experimental import pallas as pl
from jax.experimental.pallas import tpu as pltpu

LANE = 128        # padded hidden feature width (lane axis)
BN_EPS = 1e-5
MAX_TILE_B = 1024 # batch-tile cap (mem-bound: >=512 reaches ~85% of HBM roofline)


def simplenet_kernel(x_ref, w1_ref, wmid_ref, w5_ref, b_ref, o_ref):
    # x_ref:    (tile_b, in_dim) bf16   -- narrow, bf16 in HBM already
    # w1_ref:   (in_dim, 128)    bf16   -- VMEM-resident
    # wmid_ref: (3, 128, 128)    bf16   -- layers 2..4 (BN folded into slot 1)
    # w5_ref:   (1, 128)         bf16   -- layer-5 weights as a row
    # b_ref:    (8, 128)         f32    -- bias slab (rows 0..4 used, b5 at [4,0])
    # o_ref:    (1, tile_b)      f32    -- lane-dense over batch

    # Layer 1: Linear(in_dim, N) -> Dropout(identity) -> ReLU
    h = jnp.dot(x_ref[...], w1_ref[...], preferred_element_type=jnp.float32)
    h = jnp.maximum(h + b_ref[0:1, :], 0.0)

    # Layers 2..4 (BatchNorm of layer 3 already folded into wmid[1] / b_ref[2]).
    for i in range(3):
        h = jnp.dot(h.astype(jnp.bfloat16), wmid_ref[i],
                    preferred_element_type=jnp.float32)
        h = jnp.maximum(h + b_ref[i + 1:i + 2, :], 0.0)

    # Layer 5 computed transposed: contract feature dims -> (1, tile_b),
    # so the per-row scalar result is lane-dense over batch (unmasked stores).
    z = lax.dot_general(w5_ref[...], h.astype(jnp.bfloat16),
                        dimension_numbers=(((1,), (1,)), ((), ())),
                        preferred_element_type=jnp.float32)
    o_ref[...] = jnp.maximum(z + b_ref[4:5, 0:1], 0.0)


def init_params(key, input_neurons, neurons):
    """Deterministic init mimicking PyTorch Linear default U[-1/sqrt(fan_in), +...]."""
    def linear(key, fan_in, fan_out):
        kw, kb = jax.random.split(key)
        bound = 1.0 / jnp.sqrt(jnp.float32(fan_in))
        # Stored pre-transposed: (fan_in, fan_out) so the kernel computes x @ W.
        w = jax.random.uniform(kw, (fan_in, fan_out), jnp.float32, -bound, bound)
        b = jax.random.uniform(kb, (1, fan_out), jnp.float32, -bound, bound)
        return w, b

    k1, k2, k3, k4, k5 = jax.random.split(key, 5)
    w1, b1 = linear(k1, input_neurons, neurons)
    w2, b2 = linear(k2, neurons, neurons)
    w3, b3 = linear(k3, neurons, neurons)
    w4, b4 = linear(k4, neurons, neurons)
    w5, b5 = linear(k5, neurons, 1)

    # BatchNorm1d eval-mode params with freshly initialized running stats.
    g3 = jnp.ones((1, neurons), jnp.float32)
    be3 = jnp.zeros((1, neurons), jnp.float32)
    rm3 = jnp.zeros((1, neurons), jnp.float32)
    rv3 = jnp.ones((1, neurons), jnp.float32)

    return (w1, b1, w2, b2, w3, b3, g3, be3, rm3, rv3, w4, b4, w5, b5)


def pack_params(params):
    """Fold BN, lane-pad hidden dims to LANE, pack into 4 arrays, bf16 weights.

    The layer-1 weight keeps its real input width so x never needs lane padding
    in HBM; layer-5 weights are stored as a (1, LANE) row for the transposed
    final contraction.
    """
    (w1, b1, w2, b2, w3, b3, g3, be3, rm3, rv3, w4, b4, w5, b5) = params
    in_dim, n = w1.shape
    assert n <= LANE, "hidden width must fit one lane tile"

    # Fold eval-mode BatchNorm1d into the layer-3 affine.
    scale = g3 / jnp.sqrt(rv3 + BN_EPS)                 # (1, N), per output column
    w3f = w3 * scale
    b3f = (b3 - rm3) * scale + be3

    def pad_sq(w):
        out = jnp.zeros((LANE, LANE), jnp.float32)
        return out.at[:w.shape[0], :w.shape[1]].set(w)

    def pad_b(b):
        return jnp.zeros((LANE,), jnp.float32).at[:b.shape[1]].set(b[0])

    w1p = (jnp.zeros((in_dim, LANE), jnp.float32)
           .at[:, :n].set(w1).astype(jnp.bfloat16))                    # (in_dim, 128)
    wmid = jnp.stack([pad_sq(w2), pad_sq(w3f), pad_sq(w4)]).astype(jnp.bfloat16)
    w5p = (jnp.zeros((1, LANE), jnp.float32)
           .at[0, :n].set(w5[:, 0]).astype(jnp.bfloat16))              # (1, 128)

    bias = jnp.zeros((8, LANE), jnp.float32)            # full (8,128) f32 tile
    bias = bias.at[0].set(pad_b(b1)).at[1].set(pad_b(b2)).at[2].set(pad_b(b3f))
    bias = bias.at[3].set(pad_b(b4))
    bias = bias.at[4, 0].set(b5[0, 0])
    return w1p, wmid, w5p, bias


def _tiling(batch):
    if batch <= MAX_TILE_B:
        # Single grid step; block dims equal the full array dims, so the batch
        # needs no padding at all (legal even when batch % 8 != 0).
        return batch, batch
    # Multi-step: tile is a multiple of 128 (required by the lane-dense (1, tile_b)
    # output block) and the grid has >= 2 steps, so the "parallel" batch axis
    # shards across both TensorCores on v7x.
    tile_b = MAX_TILE_B
    b_pad = ((batch + tile_b - 1) // tile_b) * tile_b
    return tile_b, b_pad


@jax.jit
def simplenet_forward(x, packed):
    w1p, wmid, w5p, bias = packed
    batch, in_dim = x.shape
    tile_b, b_pad = _tiling(batch)

    # The kernel truncates to bf16 before the first matmul anyway, so casting in
    # the wrapper is bit-identical math and halves the dominant HBM read stream.
    xb = x.astype(jnp.bfloat16)
    if b_pad != batch:
        xb = jnp.zeros((b_pad, in_dim), jnp.bfloat16).at[:batch].set(xb)

    grid = (b_pad // tile_b,)
    flops = 2 * b_pad * LANE * (in_dim + 3 * LANE + 1)
    bytes_accessed = (xb.size * 2 + w1p.size * 2 + wmid.size * 2 + w5p.size * 2
                      + bias.size * 4 + b_pad * 4)

    out = pl.pallas_call(
        simplenet_kernel,
        out_shape=jax.ShapeDtypeStruct((1, b_pad), jnp.float32),
        grid=grid,
        in_specs=[
            pl.BlockSpec((tile_b, in_dim), lambda i: (i, 0)),     # x: pipelined tiles
            pl.BlockSpec((in_dim, LANE), lambda i: (0, 0)),       # w1: resident
            pl.BlockSpec((3, LANE, LANE), lambda i: (0, 0, 0)),   # w2/w3'/w4: resident
            pl.BlockSpec((1, LANE), lambda i: (0, 0)),            # w5 row: resident
            pl.BlockSpec((8, LANE), lambda i: (0, 0)),            # bias slab: resident
        ],
        out_specs=pl.BlockSpec((1, tile_b), lambda i: (0, i)),    # lane-dense output
        compiler_params=pltpu.CompilerParams(dimension_semantics=("parallel",)),
        cost_estimate=pl.CostEstimate(flops=flops, transcendentals=0,
                                      bytes_accessed=bytes_accessed),
    )(xb, w1p, wmid, w5p, bias)

    # z = z.view(x.shape[0]); result is lane-dense along the batch axis.
    return out[0, :batch]


def packed_reference(x, packed):
    """Pure-JAX replica of the kernel math (bf16 matmul operands, f32 accumulate)."""
    w1p, wmid, w5p, bias = packed
    h = jnp.dot(x.astype(jnp.bfloat16), w1p, preferred_element_type=jnp.float32)
    h = jnp.maximum(h + bias[0:1], 0.0)
    for i in range(3):
        h = jnp.dot(h.astype(jnp.bfloat16), wmid[i], preferred_element_type=jnp.float32)
        h = jnp.maximum(h + bias[i + 1:i + 2], 0.0)
    z = jnp.dot(h.astype(jnp.bfloat16), w5p.T, preferred_element_type=jnp.float32)
    z = jnp.maximum(z + bias[4, 0], 0.0)
    return z[:, 0]


def reference_forward(x, params):
    """Full-f32 reference with the original (unfolded, unpadded) module semantics."""
    (w1, b1, w2, b2, w3, b3, g3, be3, rm3, rv3, w4, b4, w5, b5) = params
    h = jnp.maximum(x @ w1 + b1, 0.0)
    h = jnp.maximum(h @ w2 + b2, 0.0)
    h = h @ w3 + b3
    h = (h - rm3) / jnp.sqrt(rv3 + BN_EPS) * g3 + be3
    h = jnp.maximum(h, 0.0)
    h = jnp.maximum(h @ w4 + b4, 0.0)
    z = jnp.maximum(h @ w5 + b5, 0.0)
    return z.reshape(x.shape[0])


if __name__ == "__main__":
    key = jax.random.PRNGKey(0)
    kx, kp = jax.random.split(key)

    batch = 8
    input_neurons = 16
    neurons = 32   # module default is 50; small value consistent with the module

    x = jax.random.normal(kx, (batch, input_neurons), jnp.float32)
    params = init_params(kp, input_neurons, neurons)
    packed = pack_params(params)

    out = jax.block_until_ready(simplenet_forward(x, packed))
    assert out.shape == (batch,)

    # Exact-structure check (same bf16 operands / f32 accumulation as the kernel).
    ref_packed = packed_reference(x, packed)
    assert jnp.allclose(out, ref_packed, atol=1e-3, rtol=1e-3), (out, ref_packed)

    # Module-semantics check against the full-f32 reference (bf16 matmul tolerance).
    ref_f32 = reference_forward(x, params)
    assert jnp.allclose(out, ref_f32, atol=5e-2, rtol=5e-2), (out, ref_f32)

    print("KERNEL_OK")
</pallas_src>

<mosaic_0001>
module attributes {stable_mosaic.version = 11 : i64} {
  func.func @simplenet_kernel(%arg0: i32, %arg1: memref<8x16xbf16, #tpu.memory_space<vmem>>, %arg2: memref<16x128xbf16, #tpu.memory_space<vmem>>, %arg3: memref<3x128x128xbf16, #tpu.memory_space<vmem>>, %arg4: memref<1x128xbf16, #tpu.memory_space<vmem>>, %arg5: memref<8x128xf32, #tpu.memory_space<vmem>>, %arg6: memref<1x8xf32, #tpu.memory_space<vmem>>) attributes {dimension_semantics = [#tpu.dimension_semantics<parallel>], iteration_bounds = array<i64: 1>, scalar_prefetch = 0 : i64, scratch_operands = 0 : i64, tpu.core_type = #tpu.core_type<tc>, window_params = [{transform_indices = @transform_0, window_bounds = array<i64: 8, 16>}, {pipeline_mode = #tpu.pipeline_mode<synchronous>, transform_indices = @transform_1, window_bounds = array<i64: 16, 128>}, {pipeline_mode = #tpu.pipeline_mode<synchronous>, transform_indices = @transform_2, window_bounds = array<i64: 3, 128, 128>}, {pipeline_mode = #tpu.pipeline_mode<synchronous>, transform_indices = @transform_3, window_bounds = array<i64: 1, 128>}, {pipeline_mode = #tpu.pipeline_mode<synchronous>, transform_indices = @transform_4, window_bounds = array<i64: 8, 128>}, {transform_indices = @transform_5, window_bounds = array<i64: 1, 8>}]} {
    %c0 = arith.constant 0 : index
    %c0_0 = arith.constant 0 : index
    %0 = vector.load %arg1[%c0, %c0_0] : memref<8x16xbf16, #tpu.memory_space<vmem>>, vector<8x16xbf16>
    %c0_1 = arith.constant 0 : index
    %c0_2 = arith.constant 0 : index
    %1 = vector.load %arg2[%c0_1, %c0_2] : memref<16x128xbf16, #tpu.memory_space<vmem>>, vector<16x128xbf16>
    %cst = arith.constant dense<0.000000e+00> : vector<8x128xf32>
    %2 = tpu.matmul %0, %1, %cst {dimension_numbers = #tpu.dot_dimension_numbers<[1], [0], [0], [1], [0, 0, 1, 1], [], []>} : vector<8x16xbf16>, vector<16x128xbf16>, vector<8x128xf32> -> vector<8x128xf32>
    %c0_3 = arith.constant 0 : index
    %c0_4 = arith.constant 0 : index
    %3 = vector.load %arg5[%c0_3, %c0_4] : memref<8x128xf32, #tpu.memory_space<vmem>>, vector<1x128xf32>
    %4 = vector.broadcast %3 : vector<1x128xf32> to vector<8x128xf32>
    %5 = arith.addf %2, %4 : vector<8x128xf32>
    %cst_5 = arith.constant 0.000000e+00 : f32
    %6 = vector.broadcast %cst_5 : f32 to vector<8x128xf32>
    %7 = arith.maximumf %5, %6 : vector<8x128xf32>
    %8 = arith.truncf %7 : vector<8x128xf32> to vector<8x128xbf16>
    %c0_6 = arith.constant 0 : index
    %c0_7 = arith.constant 0 : index
    %c0_8 = arith.constant 0 : index
    %9 = vector.load %arg3[%c0_6, %c0_7, %c0_8] : memref<3x128x128xbf16, #tpu.memory_space<vmem>>, vector<1x128x128xbf16>
    %10 = vector.shape_cast %9 : vector<1x128x128xbf16> to vector<128x128xbf16>
    %cst_9 = arith.constant dense<0.000000e+00> : vector<8x128xf32>
    %11 = tpu.matmul %8, %10, %cst_9 {dimension_numbers = #tpu.dot_dimension_numbers<[1], [0], [0], [1], [0, 0, 1, 1], [], []>} : vector<8x128xbf16>, vector<128x128xbf16>, vector<8x128xf32> -> vector<8x128xf32>
    %c1 = arith.constant 1 : index
    %c0_10 = arith.constant 0 : index
    %12 = vector.load %arg5[%c1, %c0_10] : memref<8x128xf32, #tpu.memory_space<vmem>>, vector<1x128xf32>
    %13 = vector.broadcast %12 : vector<1x128xf32> to vector<8x128xf32>
    %14 = arith.addf %11, %13 : vector<8x128xf32>
    %cst_11 = arith.constant 0.000000e+00 : f32
    %15 = vector.broadcast %cst_11 : f32 to vector<8x128xf32>
    %16 = arith.maximumf %14, %15 : vector<8x128xf32>
    %17 = arith.truncf %16 : vector<8x128xf32> to vector<8x128xbf16>
    %c1_12 = arith.constant 1 : index
    %c0_13 = arith.constant 0 : index
    %c0_14 = arith.constant 0 : index
    %18 = vector.load %arg3[%c1_12, %c0_13, %c0_14] : memref<3x128x128xbf16, #tpu.memory_space<vmem>>, vector<1x128x128xbf16>
    %19 = vector.shape_cast %18 : vector<1x128x128xbf16> to vector<128x128xbf16>
    %cst_15 = arith.constant dense<0.000000e+00> : vector<8x128xf32>
    %20 = tpu.matmul %17, %19, %cst_15 {dimension_numbers = #tpu.dot_dimension_numbers<[1], [0], [0], [1], [0, 0, 1, 1], [], []>} : vector<8x128xbf16>, vector<128x128xbf16>, vector<8x128xf32> -> vector<8x128xf32>
    %c2 = arith.constant 2 : index
    %c0_16 = arith.constant 0 : index
    %21 = vector.load %arg5[%c2, %c0_16] : memref<8x128xf32, #tpu.memory_space<vmem>>, vector<1x128xf32>
    %22 = vector.broadcast %21 : vector<1x128xf32> to vector<8x128xf32>
    %23 = arith.addf %20, %22 : vector<8x128xf32>
    %cst_17 = arith.constant 0.000000e+00 : f32
    %24 = vector.broadcast %cst_17 : f32 to vector<8x128xf32>
    %25 = arith.maximumf %23, %24 : vector<8x128xf32>
    %26 = arith.truncf %25 : vector<8x128xf32> to vector<8x128xbf16>
    %c2_18 = arith.constant 2 : index
    %c0_19 = arith.constant 0 : index
    %c0_20 = arith.constant 0 : index
    %27 = vector.load %arg3[%c2_18, %c0_19, %c0_20] : memref<3x128x128xbf16, #tpu.memory_space<vmem>>, vector<1x128x128xbf16>
    %28 = vector.shape_cast %27 : vector<1x128x128xbf16> to vector<128x128xbf16>
    %cst_21 = arith.constant dense<0.000000e+00> : vector<8x128xf32>
    %29 = tpu.matmul %26, %28, %cst_21 {dimension_numbers = #tpu.dot_dimension_numbers<[1], [0], [0], [1], [0, 0, 1, 1], [], []>} : vector<8x128xbf16>, vector<128x128xbf16>, vector<8x128xf32> -> vector<8x128xf32>
    %c3 = arith.constant 3 : index
    %c0_22 = arith.constant 0 : index
    %30 = vector.load %arg5[%c3, %c0_22] : memref<8x128xf32, #tpu.memory_space<vmem>>, vector<1x128xf32>
    %31 = vector.broadcast %30 : vector<1x128xf32> to vector<8x128xf32>
    %32 = arith.addf %29, %31 : vector<8x128xf32>
    %cst_23 = arith.constant 0.000000e+00 : f32
    %33 = vector.broadcast %cst_23 : f32 to vector<8x128xf32>
    %34 = arith.maximumf %32, %33 : vector<8x128xf32>
    %c0_24 = arith.constant 0 : index
    %c0_25 = arith.constant 0 : index
    %35 = vector.load %arg4[%c0_24, %c0_25] : memref<1x128xbf16, #tpu.memory_space<vmem>>, vector<1x128xbf16>
    %36 = arith.truncf %34 : vector<8x128xf32> to vector<8x128xbf16>
    %cst_26 = arith.constant dense<0.000000e+00> : vector<1x8xf32>
    %37 = tpu.matmul %35, %36, %cst_26 {dimension_numbers = #tpu.dot_dimension_numbers<[1], [1], [0], [0], [0, 0, 1, 0], [], []>} : vector<1x128xbf16>, vector<8x128xbf16>, vector<1x8xf32> -> vector<1x8xf32>
    %c4 = arith.constant 4 : index
    %c0_27 = arith.constant 0 : index
    %38 = vector.load %arg5[%c4, %c0_27] : memref<8x128xf32, #tpu.memory_space<vmem>>, vector<1x1xf32>
    %39 = vector.broadcast %38 : vector<1x1xf32> to vector<1x8xf32>
    %40 = arith.addf %37, %39 : vector<1x8xf32>
    %cst_28 = arith.constant 0.000000e+00 : f32
    %41 = vector.broadcast %cst_28 : f32 to vector<1x8xf32>
    %42 = arith.maximumf %40, %41 : vector<1x8xf32>
    %c0_29 = arith.constant 0 : index
    %c0_30 = arith.constant 0 : index
    %43 = vector.load %arg6[%c0_29, %c0_30] : memref<1x8xf32, #tpu.memory_space<vmem>>, vector<1x8xf32>
    tpu.vector_store %arg6[%c0_29, %c0_30], %42 {strides = array<i32>} : memref<1x8xf32, #tpu.memory_space<vmem>>, vector<1x8xf32>,
    return
  }
  func.func @transform_0(%arg0: i32) -> (i32, i32) {
    %c0_i32 = arith.constant 0 : i32
    %c0_i32_0 = arith.constant 0 : i32
    return %arg0, %c0_i32 : i32, i32
  }
  func.func @transform_1(%arg0: i32) -> (i32, i32) {
    %c0_i32 = arith.constant 0 : i32
    %c0_i32_0 = arith.constant 0 : i32
    %c0_i32_1 = arith.constant 0 : i32
    return %c0_i32, %c0_i32_0 : i32, i32
  }
  func.func @transform_2(%arg0: i32) -> (i32, i32, i32) {
    %c0_i32 = arith.constant 0 : i32
    %c0_i32_0 = arith.constant 0 : i32
    %c0_i32_1 = arith.constant 0 : i32
    %c0_i32_2 = arith.constant 0 : i32
    return %c0_i32, %c0_i32_0, %c0_i32_1 : i32, i32, i32
  }
  func.func @transform_3(%arg0: i32) -> (i32, i32) {
    %c0_i32 = arith.constant 0 : i32
    %c0_i32_0 = arith.constant 0 : i32
    %c0_i32_1 = arith.constant 0 : i32
    return %c0_i32, %c0_i32_0 : i32, i32
  }
  func.func @transform_4(%arg0: i32) -> (i32, i32) {
    %c0_i32 = arith.constant 0 : i32
    %c0_i32_0 = arith.constant 0 : i32
    %c0_i32_1 = arith.constant 0 : i32
    return %c0_i32, %c0_i32_0 : i32, i32
  }
  func.func @transform_5(%arg0: i32) -> (i32, i32) {
    %c0_i32 = arith.constant 0 : i32
    %c0_i32_0 = arith.constant 0 : i32
    return %c0_i32, %arg0 : i32, i32
  }
}

</mosaic_0001>

<llo_original>
// kernel: simplenet_forward.1
$region0: #{simplenet_forward.1}
  #allocation0 [shape = 'u32[]', space=smem, size = 0x4, offset = 0x4, fixed_abs, tag = 'smem constant byte address 0x4 - core index']
  #allocation1 [shape = 'u32[144,128]{1,0:T(1,128)}', space=vmem, size = 0x12000, scoped, tag = 'internal scratch']
  %s0 = inlined_call_operand.vmem [shape: bf16[8,16], index: 0, kind: input, shape index: {}]
  %s1 = inlined_call_operand.vmem [shape: bf16[16,128], index: 1, kind: input, shape index: {}]
  %s2 = inlined_call_operand.hbm [shape: bf16[3,128,128], index: 2, kind: input, shape index: {}]
  %s3 = inlined_call_operand.vmem [shape: bf16[1,128], index: 3, kind: input, shape index: {}]
  %s4 = inlined_call_operand.vmem [shape: f32[8,128], index: 4, kind: input, shape index: {}]
  %s5 = inlined_call_operand.hbm [shape: f32[1,8], index: 5, kind: output, shape index: {}]
  %s6 = sld [smem:[#allocation0]]
  $region34: #{simplenet_forward.1} parent=0
    _
  %s8 = ssub.s32 1, %s6
  %s9 = scalar_select 0, %s8, %s6
  $region1: #{simplenet_forward.1} parent=0
    #allocation2 [shape = 'u8[98304]{0}', space=vmem, size = 0x18000, scoped, tag = 'input window, operand 2, single buffered']
    #allocation3 [shape = 's32[1]{0}', space=sflag, size = 0x4, scoped, tag = 'scoped memory for simplenet_forward.1']
    #allocation4 [shape = 's32[1]{0}', space=sflag, size = 0x4, scoped, tag = 'scoped memory for simplenet_forward.1']
    #allocation5 [shape = 'u8[512]{0}', space=vmem, size = 0x400, scoped, tag = 'output window, operand 0, single buffered']
    %10 = vsyncpa [#allocation3], 0
    %11 = vsyncpa [#allocation4], 0
    // Predicated region
    $region2: #{simplenet_forward.1} parent=1 // pred_check
      _
    $region3: #{simplenet_forward.1} parent=1 // pred_check_branch
      %13 = sbr.rel (0) target = $region5
    $region4: #{simplenet_forward.1} parent=1 // pred_region
      _
    $region5: #{simplenet_forward.1} parent=1 // pred_fallthru
      _
    // Predicated region
    $region6: #{simplenet_forward.1} parent=1 // pred_check
      _
    $region7: #{simplenet_forward.1} parent=1 // pred_check_branch
      %15 = sbr.rel (0) target = $region9
    $region8: #{simplenet_forward.1} parent=1 // pred_region
      _
    $region9: #{simplenet_forward.1} parent=1 // pred_fallthru
      _
    // Predicated region
    $region10: #{simplenet_forward.1} parent=1 // pred_check
      _
    $region11: #{simplenet_forward.1} parent=1 // pred_check_branch
      %17 = sbr.rel (0) target = $region13
    $region12: #{simplenet_forward.1} parent=1 // pred_region
      %s19 = ssub.s32 3072, 3072
      %20 = vsyncadd [#allocation3], %s19
      %s21 = sshll.u32 [#allocation2], 4
      %s22 = int_to_ptr.vmem [resolvable:$true] %s21
      %27 = dma.hbm_to_vmem [thread:$0]  %s2, 3072, %s22, [#allocation3], 64, 64, 4
    $region13: #{simplenet_forward.1} parent=1 // pred_fallthru
      _
    // Predicated region
    $region14: #{simplenet_forward.1} parent=1 // pred_check
      _
    $region15: #{simplenet_forward.1} parent=1 // pred_check_branch
      %29 = sbr.rel (0) target = $region17
    $region16: #{simplenet_forward.1} parent=1 // pred_region
      _
    $region17: #{simplenet_forward.1} parent=1 // pred_fallthru
      _
    // Predicated region
    $region18: #{simplenet_forward.1} parent=1 // pred_check
      _
    $region19: #{simplenet_forward.1} parent=1 // pred_check_branch
      %31 = sbr.rel (0) target = $region21
    $region20: #{simplenet_forward.1} parent=1 // pred_region
      _
    $region21: #{simplenet_forward.1} parent=1 // pred_fallthru
      _
    // Predicated region
    $region22: #{simplenet_forward.1} parent=1 // pred_check
      _
    $region23: #{simplenet_forward.1} parent=1 // pred_check_branch
      %33 = sbr.rel (0) target = $region25
    $region24: #{simplenet_forward.1} parent=1 // pred_region
      %34 = dma.done [#allocation3], 3072
    $region25: #{simplenet_forward.1} parent=1 // pred_fallthru
      _
    %v36 = vld [vmem:[%s0] sm:$0xf]
    %v37 = vld [vmem:[%s1] sm:$0xf]
    %v38 = vld [vmem:[%s1 + $0x4] sm:$0xf]
    %v39 = vld [vmem:[%s4] sm:$0x1]
    %v40 = vlaneseq
    %v41 = vshrl.u32 %v40, 7
    %v42 = vsub.s32 0, %v41
    %v43 = vrot.slane %v39, %v42
    %v46 = vunpack.c.l.b16 %v37
    %v47 = vunpack.c.l.b16 %v38
    %v48 = vpack.c.b16 %v47, %v46
    %vm50 = vcmask 130048
    %v52 = vsel %vm50, %v36, 0
    %54 = vmatprep.subr.bf16.mxu0 0
    %55 = vmatpush1.bf16.msra.mxu0 0
    %56 = vmatprep.subr.bf16.mxu0 0
    %57 = vmatpush1.bf16.msra.mxu0 0
    %58 = vmatprep.subr.bf16.mxu0 0
    %59 = vmatpush1.bf16.msra.mxu0 0
    %60 = vmatprep.subr.bf16.mxu0 0
    %61 = vmatpush1.bf16.msra.mxu0 0
    %62 = vmatprep.subr.bf16.mxu0 0
    %63 = vmatpush1.bf16.msra.mxu0 0
    %64 = vmatprep.subr.bf16.mxu0 0
    %65 = vmatpush1.bf16.msra.mxu0 0
    %66 = vmatprep.subr.bf16.mxu0 0
    %67 = vmatpush1.bf16.msra.mxu0 0
    %68 = vmatprep.subr.bf16.mxu0 0
    %69 = vmatpush1.bf16.msra.mxu0 %v48
    %70 = vmatprep.subr.bf16.mxu0 0
    %71 = vmatpush2.bf16.msra.mxu0 0
    %72 = vmatprep.subr.bf16.mxu0 0
    %73 = vmatpush2.bf16.msra.mxu0 0
    %74 = vmatprep.subr.bf16.mxu0 0
    %75 = vmatpush2.bf16.msra.mxu0 0
    %76 = vmatprep.subr.bf16.mxu0 0
    %77 = vmatpush2.bf16.msra.mxu0 0
    %78 = vmatprep.subr.bf16.mxu0 0
    %79 = vmatpush2.bf16.msra.mxu0 0
    %80 = vmatprep.subr.bf16.mxu0 0
    %81 = vmatpush2.bf16.msra.mxu0 0
    %82 = vmatprep.subr.bf16.mxu0 0
    %83 = vmatpush2.bf16.msra.mxu0 0
    %84 = vmatprep.subr.bf16.mxu0 0
    %85 = vmatpush2.bf16.msra.mxu0 0
    %86 = vmatprep.mubr.bf16.mxu0 0
    %87 = vmatmul.mubr.bf16.gmra.mxu0 %v52
    %v88 = vpop.f32.mrf.mxu0
    %v89 = vadd.f32 %v43, %v88
    %v90 = vpop.f32.mrf.mxu0
    %v91 = vpop.f32.mrf.mxu0
    %v92 = vpop.f32.mrf.mxu0
    %93 = vdwg.mxu0
    %v94 = vmax.f32 %v89, 0.0
    %v95 = vpack.c.bf16 %v94, %v94
    %v96 = vld [vmem:[#allocation2] sm:$0xf]
    %v97 = vld [vmem:[#allocation2 + $0x4] sm:$0xf]
    %v98 = vld [vmem:[#allocation2 + $0x8] sm:$0xf]
    %v99 = vld [vmem:[#allocation2 + $0xc] sm:$0xf]
    %v100 = vld [vmem:[#allocation2 + $0x10] sm:$0xf]
    %v101 = vld [vmem:[#allocation2 + $0x14] sm:$0xf]
    %v102 = vld [vmem:[#allocation2 + $0x18] sm:$0xf]
    %v103 = vld [vmem:[#allocation2 + $0x1c] sm:$0xf]
    %v104 = vld [vmem:[#allocation2 + $0x20] sm:$0xf]
    %v105 = vld [vmem:[#allocation2 + $0x24] sm:$0xf]
    %v106 = vld [vmem:[#allocation2 + $0x28] sm:$0xf]
    %v107 = vld [vmem:[#allocation2 + $0x2c] sm:$0xf]
    %v108 = vld [vmem:[#allocation2 + $0x30] sm:$0xf]
    %v109 = vld [vmem:[#allocation2 + $0x34] sm:$0xf]
    %v110 = vld [vmem:[#allocation2 + $0x38] sm:$0xf]
    %v111 = vld [vmem:[#allocation2 + $0x3c] sm:$0xf]
    %v112 = vld [vmem:[%s4 + $0x1] sm:$0x1]
    %v113 = vlaneseq
    %v114 = vshrl.u32 %v113, 7
    %v115 = vsub.s32 0, %v114
    %v116 = vrot.slane %v112, %v115
    %v133 = vunpack.c.l.b16 %v96
    %v134 = vunpack.c.l.b16 %v97
    %v135 = vunpack.c.l.b16 %v98
    %v136 = vunpack.c.l.b16 %v99
    %v137 = vunpack.c.l.b16 %v100
    %v138 = vunpack.c.l.b16 %v101
    %v139 = vunpack.c.l.b16 %v102
    %v140 = vunpack.c.l.b16 %v103
    %v141 = vunpack.c.l.b16 %v104
    %v142 = vunpack.c.l.b16 %v105
    %v143 = vunpack.c.l.b16 %v106
    %v144 = vunpack.c.l.b16 %v107
    %v145 = vunpack.c.l.b16 %v108
    %v146 = vunpack.c.l.b16 %v109
    %v147 = vunpack.c.l.b16 %v110
    %v148 = vunpack.c.l.b16 %v111
    %v149 = vpack.c.b16 %v134, %v133
    %v150 = vpack.c.b16 %v136, %v135
    %v151 = vpack.c.b16 %v138, %v137
    %v152 = vpack.c.b16 %v140, %v139
    %v153 = vpack.c.b16 %v142, %v141
    %v154 = vpack.c.b16 %v144, %v143
    %v155 = vpack.c.b16 %v146, %v145
    %v156 = vpack.c.b16 %v148, %v147
    %165 = vmatprep.subr.bf16.mxu0 0
    %166 = vmatpush1.bf16.msra.mxu0 %v156
    %167 = vmatprep.subr.bf16.mxu0 0
    %168 = vmatpush1.bf16.msra.mxu0 %v155
    %169 = vmatprep.subr.bf16.mxu0 0
    %170 = vmatpush1.bf16.msra.mxu0 %v154
    %171 = vmatprep.subr.bf16.mxu0 0
    %172 = vmatpush1.bf16.msra.mxu0 %v153
    %173 = vmatprep.subr.bf16.mxu0 0
    %174 = vmatpush1.bf16.msra.mxu0 %v152
    %175 = vmatprep.subr.bf16.mxu0 0
    %176 = vmatpush1.bf16.msra.mxu0 %v151
    %177 = vmatprep.subr.bf16.mxu0 0
    %178 = vmatpush1.bf16.msra.mxu0 %v150
    %179 = vmatprep.subr.bf16.mxu0 0
    %180 = vmatpush1.bf16.msra.mxu0 %v149
    %181 = vmatprep.subr.bf16.mxu0 0
    %182 = vmatpush2.bf16.msra.mxu0 0
    %183 = vmatprep.subr.bf16.mxu0 0
    %184 = vmatpush2.bf16.msra.mxu0 0
    %185 = vmatprep.subr.bf16.mxu0 0
    %186 = vmatpush2.bf16.msra.mxu0 0
    %187 = vmatprep.subr.bf16.mxu0 0
    %188 = vmatpush2.bf16.msra.mxu0 0
    %189 = vmatprep.subr.bf16.mxu0 0
    %190 = vmatpush2.bf16.msra.mxu0 0
    %191 = vmatprep.subr.bf16.mxu0 0
    %192 = vmatpush2.bf16.msra.mxu0 0
    %193 = vmatprep.subr.bf16.mxu0 0
    %194 = vmatpush2.bf16.msra.mxu0 0
    %195 = vmatprep.subr.bf16.mxu0 0
    %196 = vmatpush2.bf16.msra.mxu0 0
    %197 = vmatprep.mubr.bf16.mxu0 0
    %198 = vmatmul.mubr.bf16.gmra.mxu0 %v95
    %v199 = vpop.f32.mrf.mxu0
    %v200 = vadd.f32 %v116, %v199
    %v201 = vpop.f32.mrf.mxu0
    %v202 = vpop.f32.mrf.mxu0
    %v203 = vpop.f32.mrf.mxu0
    %204 = vdwg.mxu0
    %v205 = vmax.f32 %v200, 0.0
    %v206 = vpack.c.bf16 %v205, %v205
    %s207 = scalar_lea.vmem [#allocation2], 64
    %v208 = vld [vmem:[%s207] sm:$0xf]
    %v209 = vld [vmem:[%s207 + $0x4] sm:$0xf]
    %v210 = vld [vmem:[%s207 + $0x8] sm:$0xf]
    %v211 = vld [vmem:[%s207 + $0xc] sm:$0xf]
    %v212 = vld [vmem:[%s207 + $0x10] sm:$0xf]
    %v213 = vld [vmem:[%s207 + $0x14] sm:$0xf]
    %v214 = vld [vmem:[%s207 + $0x18] sm:$0xf]
    %v215 = vld [vmem:[%s207 + $0x1c] sm:$0xf]
    %v216 = vld [vmem:[%s207 + $0x20] sm:$0xf]
    %v217 = vld [vmem:[%s207 + $0x24] sm:$0xf]
    %v218 = vld [vmem:[%s207 + $0x28] sm:$0xf]
    %v219 = vld [vmem:[%s207 + $0x2c] sm:$0xf]
    %v220 = vld [vmem:[%s207 + $0x30] sm:$0xf]
    %v221 = vld [vmem:[%s207 + $0x34] sm:$0xf]
    %v222 = vld [vmem:[%s207 + $0x38] sm:$0xf]
    %v223 = vld [vmem:[%s207 + $0x3c] sm:$0xf]
    %v224 = vld [vmem:[%s4 + $0x2] sm:$0x1]
    %v225 = vlaneseq
    %v226 = vshrl.u32 %v225, 7
    %v227 = vsub.s32 0, %v226
    %v228 = vrot.slane %v224, %v227
    %v245 = vunpack.c.l.b16 %v208
    %v246 = vunpack.c.l.b16 %v209
    %v247 = vunpack.c.l.b16 %v210
    %v248 = vunpack.c.l.b16 %v211
    %v249 = vunpack.c.l.b16 %v212
    %v250 = vunpack.c.l.b16 %v213
    %v251 = vunpack.c.l.b16 %v214
    %v252 = vunpack.c.l.b16 %v215
    %v253 = vunpack.c.l.b16 %v216
    %v254 = vunpack.c.l.b16 %v217
    %v255 = vunpack.c.l.b16 %v218
    %v256 = vunpack.c.l.b16 %v219
    %v257 = vunpack.c.l.b16 %v220
    %v258 = vunpack.c.l.b16 %v221
    %v259 = vunpack.c.l.b16 %v222
    %v260 = vunpack.c.l.b16 %v223
    %v261 = vpack.c.b16 %v246, %v245
    %v262 = vpack.c.b16 %v248, %v247
    %v263 = vpack.c.b16 %v250, %v249
    %v264 = vpack.c.b16 %v252, %v251
    %v265 = vpack.c.b16 %v254, %v253
    %v266 = vpack.c.b16 %v256, %v255
    %v267 = vpack.c.b16 %v258, %v257
    %v268 = vpack.c.b16 %v260, %v259
    %277 = vmatprep.subr.bf16.mxu0 0
    %278 = vmatpush1.bf16.msra.mxu0 %v268
    %279 = vmatprep.subr.bf16.mxu0 0
    %280 = vmatpush1.bf16.msra.mxu0 %v267
    %281 = vmatprep.subr.bf16.mxu0 0
    %282 = vmatpush1.bf16.msra.mxu0 %v266
    %283 = vmatprep.subr.bf16.mxu0 0
    %284 = vmatpush1.bf16.msra.mxu0 %v265
    %285 = vmatprep.subr.bf16.mxu0 0
    %286 = vmatpush1.bf16.msra.mxu0 %v264
    %287 = vmatprep.subr.bf16.mxu0 0
    %288 = vmatpush1.bf16.msra.mxu0 %v263
    %289 = vmatprep.subr.bf16.mxu0 0
    %290 = vmatpush1.bf16.msra.mxu0 %v262
    %291 = vmatprep.subr.bf16.mxu0 0
    %292 = vmatpush1.bf16.msra.mxu0 %v261
    %293 = vmatprep.subr.bf16.mxu0 0
    %294 = vmatpush2.bf16.msra.mxu0 0
    %295 = vmatprep.subr.bf16.mxu0 0
    %296 = vmatpush2.bf16.msra.mxu0 0
    %297 = vmatprep.subr.bf16.mxu0 0
    %298 = vmatpush2.bf16.msra.mxu0 0
    %299 = vmatprep.subr.bf16.mxu0 0
    %300 = vmatpush2.bf16.msra.mxu0 0
    %301 = vmatprep.subr.bf16.mxu0 0
    %302 = vmatpush2.bf16.msra.mxu0 0
    %303 = vmatprep.subr.bf16.mxu0 0
    %304 = vmatpush2.bf16.msra.mxu0 0
    %305 = vmatprep.subr.bf16.mxu0 0
    %306 = vmatpush2.bf16.msra.mxu0 0
    %307 = vmatprep.subr.bf16.mxu0 0
    %308 = vmatpush2.bf16.msra.mxu0 0
    %309 = vmatprep.mubr.bf16.mxu0 0
    %310 = vmatmul.mubr.bf16.gmra.mxu0 %v206
    %v311 = vpop.f32.mrf.mxu0
    %v312 = vadd.f32 %v228, %v311
    %v313 = vpop.f32.mrf.mxu0
    %v314 = vpop.f32.mrf.mxu0
    %v315 = vpop.f32.mrf.mxu0
    %316 = vdwg.mxu0
    %v317 = vmax.f32 %v312, 0.0
    %v318 = vpack.c.bf16 %v317, %v317
    %s319 = scalar_lea.vmem [#allocation2], 128
    %v320 = vld [vmem:[%s319] sm:$0xf]
    %v321 = vld [vmem:[%s319 + $0x4] sm:$0xf]
    %v322 = vld [vmem:[%s319 + $0x8] sm:$0xf]
    %v323 = vld [vmem:[%s319 + $0xc] sm:$0xf]
    %v324 = vld [vmem:[%s319 + $0x10] sm:$0xf]
    %v325 = vld [vmem:[%s319 + $0x14] sm:$0xf]
    %v326 = vld [vmem:[%s319 + $0x18] sm:$0xf]
    %v327 = vld [vmem:[%s319 + $0x1c] sm:$0xf]
    %v328 = vld [vmem:[%s319 + $0x20] sm:$0xf]
    %v329 = vld [vmem:[%s319 + $0x24] sm:$0xf]
    %v330 = vld [vmem:[%s319 + $0x28] sm:$0xf]
    %v331 = vld [vmem:[%s319 + $0x2c] sm:$0xf]
    %v332 = vld [vmem:[%s319 + $0x30] sm:$0xf]
    %v333 = vld [vmem:[%s319 + $0x34] sm:$0xf]
    %v334 = vld [vmem:[%s319 + $0x38] sm:$0xf]
    %v335 = vld [vmem:[%s319 + $0x3c] sm:$0xf]
    %v336 = vld [vmem:[%s4 + $0x3] sm:$0x1]
    %v337 = vlaneseq
    %v338 = vshrl.u32 %v337, 7
    %v339 = vsub.s32 0, %v338
    %v340 = vrot.slane %v336, %v339
    %v357 = vunpack.c.l.b16 %v320
    %v358 = vunpack.c.l.b16 %v321
    %v359 = vunpack.c.l.b16 %v322
    %v360 = vunpack.c.l.b16 %v323
    %v361 = vunpack.c.l.b16 %v324
    %v362 = vunpack.c.l.b16 %v325
    %v363 = vunpack.c.l.b16 %v326
    %v364 = vunpack.c.l.b16 %v327
    %v365 = vunpack.c.l.b16 %v328
    %v366 = vunpack.c.l.b16 %v329
    %v367 = vunpack.c.l.b16 %v330
    %v368 = vunpack.c.l.b16 %v331
    %v369 = vunpack.c.l.b16 %v332
    %v370 = vunpack.c.l.b16 %v333
    %v371 = vunpack.c.l.b16 %v334
    %v372 = vunpack.c.l.b16 %v335
    %v373 = vpack.c.b16 %v358, %v357
    %v374 = vpack.c.b16 %v360, %v359
    %v375 = vpack.c.b16 %v362, %v361
    %v376 = vpack.c.b16 %v364, %v363
    %v377 = vpack.c.b16 %v366, %v365
    %v378 = vpack.c.b16 %v368, %v367
    %v379 = vpack.c.b16 %v370, %v369
    %v380 = vpack.c.b16 %v372, %v371
    %389 = vmatprep.subr.bf16.mxu0 0
    %390 = vmatpush1.bf16.msra.mxu0 %v380
    %391 = vmatprep.subr.bf16.mxu0 0
    %392 = vmatpush1.bf16.msra.mxu0 %v379
    %393 = vmatprep.subr.bf16.mxu0 0
    %394 = vmatpush1.bf16.msra.mxu0 %v378
    %395 = vmatprep.subr.bf16.mxu0 0
    %396 = vmatpush1.bf16.msra.mxu0 %v377
    %397 = vmatprep.subr.bf16.mxu0 0
    %398 = vmatpush1.bf16.msra.mxu0 %v376
    %399 = vmatprep.subr.bf16.mxu0 0
    %400 = vmatpush1.bf16.msra.mxu0 %v375
    %401 = vmatprep.subr.bf16.mxu0 0
    %402 = vmatpush1.bf16.msra.mxu0 %v374
    %403 = vmatprep.subr.bf16.mxu0 0
    %404 = vmatpush1.bf16.msra.mxu0 %v373
    %405 = vmatprep.subr.bf16.mxu0 0
    %406 = vmatpush2.bf16.msra.mxu0 0
    %407 = vmatprep.subr.bf16.mxu0 0
    %408 = vmatpush2.bf16.msra.mxu0 0
    %409 = vmatprep.subr.bf16.mxu0 0
    %410 = vmatpush2.bf16.msra.mxu0 0
    %411 = vmatprep.subr.bf16.mxu0 0
    %412 = vmatpush2.bf16.msra.mxu0 0
    %413 = vmatprep.subr.bf16.mxu0 0
    %414 = vmatpush2.bf16.msra.mxu0 0
    %415 = vmatprep.subr.bf16.mxu0 0
    %416 = vmatpush2.bf16.msra.mxu0 0
    %417 = vmatprep.subr.bf16.mxu0 0
    %418 = vmatpush2.bf16.msra.mxu0 0
    %419 = vmatprep.subr.bf16.mxu0 0
    %420 = vmatpush2.bf16.msra.mxu0 0
    %421 = vmatprep.mubr.bf16.mxu0 0
    %422 = vmatmul.mubr.bf16.gmra.mxu0 %v318
    %v423 = vpop.f32.mrf.mxu0
    %v424 = vadd.f32 %v340, %v423
    %v425 = vpop.f32.mrf.mxu0
    %v426 = vpop.f32.mrf.mxu0
    %v427 = vpop.f32.mrf.mxu0
    %428 = vdwg.mxu0
    %v429 = vmax.f32 %v424, 0.0
    %v430 = vld [vmem:[%s3] sm:$0x1]
    %v431 = vpack.c.bf16 %v429, %v429
    %v432 = vld [vmem:[%s4 + $0x4] sm:$0x1]
    %434 = vset.pattern.permute.xlu0 0
    %435 = vperm.xlu0 %434, %v432
    %v436 = vpop.permute.xlu0 %435
    %438 = vmatprep.subr.bf16.mxu0 0
    %439 = vmatpush1.bf16.xpose.msra.mxu0 0
    %440 = vmatprep.subr.bf16.mxu0 0
    %441 = vmatpush1.bf16.xpose.msra.mxu0 0
    %442 = vmatprep.subr.bf16.mxu0 0
    %443 = vmatpush1.bf16.xpose.msra.mxu0 0
    %444 = vmatprep.subr.bf16.mxu0 0
    %445 = vmatpush1.bf16.xpose.msra.mxu0 0
    %446 = vmatprep.subr.bf16.mxu0 0
    %447 = vmatpush1.bf16.xpose.msra.mxu0 0
    %448 = vmatprep.subr.bf16.mxu0 0
    %449 = vmatpush1.bf16.xpose.msra.mxu0 0
    %450 = vmatprep.subr.bf16.mxu0 0
    %451 = vmatpush1.bf16.xpose.msra.mxu0 0
    %452 = vmatprep.subr.bf16.mxu0 0
    %453 = vmatpush1.bf16.xpose.msra.mxu0 %v431
    %454 = vmatprep.subr.bf16.mxu0 0
    %455 = vmatpush2.bf16.xpose.msra.mxu0 0
    %456 = vmatprep.subr.bf16.mxu0 0
    %457 = vmatpush2.bf16.xpose.msra.mxu0 0
    %458 = vmatprep.subr.bf16.mxu0 0
    %459 = vmatpush2.bf16.xpose.msra.mxu0 0
    %460 = vmatprep.subr.bf16.mxu0 0
    %461 = vmatpush2.bf16.xpose.msra.mxu0 0
    %462 = vmatprep.subr.bf16.mxu0 0
    %463 = vmatpush2.bf16.xpose.msra.mxu0 0
    %464 = vmatprep.subr.bf16.mxu0 0
    %465 = vmatpush2.bf16.xpose.msra.mxu0 0
    %466 = vmatprep.subr.bf16.mxu0 0
    %467 = vmatpush2.bf16.xpose.msra.mxu0 0
    %468 = vmatprep.subr.bf16.mxu0 0
    %469 = vmatpush2.bf16.xpose.msra.mxu0 0
    %470 = vmatprep.mubr.bf16.mxu0 0
    %471 = vmatmul.mubr.bf16.gmra.mxu0 %v430
    %v472 = vpop.f32.mrf.mxu0
    %v473 = vadd.f32 %v436, %v472
    %v474 = vpop.f32.mrf.mxu0
    %v475 = vpop.f32.mrf.mxu0
    %v476 = vpop.f32.mrf.mxu0
    %477 = vdwg.mxu0
    %v478 = vmax.f32 %v473, 0.0
    %vm479 = vcmask 57344
    %480 = vst.msk [vmem:[#allocation5] sm:$0x1] %vm479, %v478
    // Predicated region
    $region26: #{simplenet_forward.1} parent=1 // pred_check
      _
    $region27: #{simplenet_forward.1} parent=1 // pred_check_branch
      %482 = sbr.rel (0) target = $region29
    $region28: #{simplenet_forward.1} parent=1 // pred_region
      %s484 = ssub.s32 16, 16
      %485 = vsyncadd [#allocation4], %s484
      %s487 = sshll.u32 [#allocation5], 4
      %s488 = int_to_ptr.vmem [resolvable:$true] %s487
      %490 = dma.vmem_to_hbm [thread:$0]  %s488, 16, %s5, [#allocation4]
    $region29: #{simplenet_forward.1} parent=1 // pred_fallthru
      _
    // Predicated region
    $region30: #{simplenet_forward.1} parent=1 // pred_check
      _
    $region31: #{simplenet_forward.1} parent=1 // pred_check_branch
      %492 = sbr.rel (0) target = $region33
    $region32: #{simplenet_forward.1} parent=1 // pred_region
      %493 = dma.done [#allocation4], 16
    $region33: #{simplenet_forward.1} parent=1 // pred_fallthru
      _
    %494 = vsyncpa [#allocation3], 1
    %495 = vsyncpa [#allocation4], 1

</llo_original>
